<compile_context>
chip_gen: v6e
topology: v6e:2x2x1
jax: 0.10.0
libtpu: 0.0.40
codegen_flags: <defaults>
</compile_context>

<pallas_src>
import functools

import jax
import jax.numpy as jnp
from jax.experimental import pallas as pl
from jax.experimental.pallas import tpu as pltpu

EPS = 1e-5

_FUSED_BLOCK_BUDGET = 4 * 1024 * 1024    # max bytes of one (N, tc, HW) block
_VMEM_LIMIT = 48 * 1024 * 1024           # <= v7x physical (64 MiB)


def _pick_tile(dim, align, cap):
    """Largest divisor of `dim` that is <= cap and (multiple of `align` or == dim)."""
    for d in range(min(dim, cap), 0, -1):
        if dim % d == 0 and (d % align == 0 or d == dim):
            return d
    return dim


# ----------------------------------------------------------------------------
# Fused single-pass kernel (whole (N, tc, HW) channel slab resident in VMEM).
# ----------------------------------------------------------------------------
def _bn_fused_kernel(x_ref, gamma_ref, beta_ref, o_ref, *, inv_count):
    # x_ref: (N, tc, HW)   gamma/beta: (tc, 1)
    x = x_ref[...].astype(jnp.float32)
    # Single sweep: sum and sum-of-squares; biased variance = E[x^2] - mean^2.
    s = jnp.sum(jnp.sum(x, axis=0), axis=-1, keepdims=True)        # (tc, 1)
    ss = jnp.sum(jnp.sum(x * x, axis=0), axis=-1, keepdims=True)   # (tc, 1)
    mean = s * inv_count
    var = ss * inv_count - mean * mean
    # Fold per-channel factors so the normalize sweep is x*scale + shift.
    scale = jax.lax.rsqrt(var + EPS) * gamma_ref[...]               # (tc, 1)
    shift = beta_ref[...] - mean * scale                            # (tc, 1)
    o_ref[...] = (x * scale[None] + shift[None]).astype(o_ref.dtype)


def _bn_fused(x3, gamma2, beta2, tc):
    n, c, hw = x3.shape
    kern = functools.partial(_bn_fused_kernel, inv_count=1.0 / (n * hw))
    return pl.pallas_call(
        kern,
        out_shape=jax.ShapeDtypeStruct((n, c, hw), x3.dtype),
        grid_spec=pltpu.PrefetchScalarGridSpec(
            num_scalar_prefetch=0,
            grid=(c // tc,),
            in_specs=[
                pl.BlockSpec((n, tc, hw), lambda ci: (0, ci, 0)),
                pl.BlockSpec((tc, 1), lambda ci: (ci, 0)),
                pl.BlockSpec((tc, 1), lambda ci: (ci, 0)),
            ],
            out_specs=pl.BlockSpec((n, tc, hw), lambda ci: (0, ci, 0)),
        ),
        compiler_params=pltpu.CompilerParams(
            dimension_semantics=("parallel",),
            vmem_limit_bytes=_VMEM_LIMIT,
        ),
    )(x3, gamma2, beta2)


# ----------------------------------------------------------------------------
# Tiled two-phase path: phase 1 = stats accumulation, phase 2 = normalize.
# ----------------------------------------------------------------------------
def _bn_stats_kernel(x_ref, gamma_ref, beta_ref, scale_ref, shift_ref,
                     sum_ref, ssq_ref, *, inv_count):
    # x_ref: (1, tc, t_hw)   gamma/beta/scale/shift/sum/ssq: (tc, 1)
    ni = pl.program_id(1)
    hi = pl.program_id(2)

    @pl.when((ni == 0) & (hi == 0))
    def _():
        sum_ref[...] = jnp.zeros_like(sum_ref)
        ssq_ref[...] = jnp.zeros_like(ssq_ref)

    x = x_ref[0].astype(jnp.float32)                                # (tc, t_hw)
    sum_ref[...] += jnp.sum(x, axis=-1, keepdims=True)
    ssq_ref[...] += jnp.sum(x * x, axis=-1, keepdims=True)

    @pl.when((ni == pl.num_programs(1) - 1) & (hi == pl.num_programs(2) - 1))
    def _():
        mean = sum_ref[...] * inv_count
        var = ssq_ref[...] * inv_count - mean * mean
        scale = jax.lax.rsqrt(var + EPS) * gamma_ref[...]
        scale_ref[...] = scale
        shift_ref[...] = beta_ref[...] - mean * scale


def _bn_apply_kernel(x_ref, scale_ref, shift_ref, o_ref):
    # x_ref/o_ref: (1, tc, t_hw)   scale/shift: (tc, 1)
    x = x_ref[...].astype(jnp.float32)
    y = x * scale_ref[...][None] + shift_ref[...][None]
    o_ref[...] = y.astype(o_ref.dtype)


def _bn_two_phase(x3, gamma2, beta2, tc, t_hw):
    n, c, hw = x3.shape
    grid = (c // tc, n, hw // t_hw)
    inv_count = 1.0 / (n * hw)

    scale, shift = pl.pallas_call(
        functools.partial(_bn_stats_kernel, inv_count=inv_count),
        out_shape=(jax.ShapeDtypeStruct((c, 1), jnp.float32),
                   jax.ShapeDtypeStruct((c, 1), jnp.float32)),
        grid_spec=pltpu.PrefetchScalarGridSpec(
            num_scalar_prefetch=0,
            grid=grid,
            in_specs=[
                pl.BlockSpec((1, tc, t_hw), lambda ci, ni, hi: (ni, ci, hi)),
                pl.BlockSpec((tc, 1), lambda ci, ni, hi: (ci, 0)),
                pl.BlockSpec((tc, 1), lambda ci, ni, hi: (ci, 0)),
            ],
            out_specs=[pl.BlockSpec((tc, 1), lambda ci, ni, hi: (ci, 0)),
                       pl.BlockSpec((tc, 1), lambda ci, ni, hi: (ci, 0))],
            scratch_shapes=[pltpu.VMEM((tc, 1), jnp.float32),
                            pltpu.VMEM((tc, 1), jnp.float32)],
        ),
        compiler_params=pltpu.CompilerParams(
            dimension_semantics=("parallel", "arbitrary", "arbitrary"),
            vmem_limit_bytes=_VMEM_LIMIT,
        ),
    )(x3, gamma2, beta2)

    out = pl.pallas_call(
        _bn_apply_kernel,
        out_shape=jax.ShapeDtypeStruct((n, c, hw), x3.dtype),
        grid_spec=pltpu.PrefetchScalarGridSpec(
            num_scalar_prefetch=0,
            grid=grid,
            in_specs=[
                pl.BlockSpec((1, tc, t_hw), lambda ci, ni, hi: (ni, ci, hi)),
                pl.BlockSpec((tc, 1), lambda ci, ni, hi: (ci, 0)),
                pl.BlockSpec((tc, 1), lambda ci, ni, hi: (ci, 0)),
            ],
            out_specs=pl.BlockSpec((1, tc, t_hw),
                                   lambda ci, ni, hi: (ni, ci, hi)),
        ),
        compiler_params=pltpu.CompilerParams(
            dimension_semantics=("parallel", "parallel", "parallel"),
            vmem_limit_bytes=_VMEM_LIMIT,
        ),
    )(x3, scale, shift)
    return out


# ----------------------------------------------------------------------------
# Wrapper
# ----------------------------------------------------------------------------
def batchnorm2d_pallas(x_nchw, gamma, beta, *, force_two_phase=False):
    """BatchNorm2d with training-mode batch statistics on an NCHW input."""
    n, c, h, w = x_nchw.shape
    hw = h * w
    # Layout-preserving reshapes only -- no transposes around the kernel.
    x3 = x_nchw.reshape(n, c, hw)
    gamma2 = gamma.reshape(c, 1).astype(jnp.float32)
    beta2 = beta.reshape(c, 1).astype(jnp.float32)

    tc = _pick_tile(c, 8, 128)
    block_bytes = n * tc * hw * x3.dtype.itemsize
    if not force_two_phase and block_bytes <= _FUSED_BLOCK_BUDGET:
        out3 = _bn_fused(x3, gamma2, beta2, tc)
    else:
        t_hw = _pick_tile(hw, 128, 2048)
        out3 = _bn_two_phase(x3, gamma2, beta2, tc, t_hw)
    return out3.reshape(n, c, h, w)


def _reference(x, gamma, beta):
    c = x.shape[1]
    mean = jnp.mean(x, axis=(0, 2, 3), keepdims=True)
    var = jnp.mean((x - mean) ** 2, axis=(0, 2, 3), keepdims=True)
    return (x - mean) * jax.lax.rsqrt(var + EPS) * gamma.reshape(1, c, 1, 1) \
        + beta.reshape(1, c, 1, 1)


if __name__ == "__main__":
    key = jax.random.PRNGKey(0)
    kx, kg, kb, kx2 = jax.random.split(key, 4)

    # Shape implied by the module: BatchNorm2d(384) applied to [1, 384, 7, 7].
    N, C, H, W = 1, 384, 7, 7
    x = jax.random.normal(kx, (N, C, H, W), dtype=jnp.float32)
    gamma = 1.0 + 0.1 * jax.random.normal(kg, (C,), dtype=jnp.float32)
    beta = 0.1 * jax.random.normal(kb, (C,), dtype=jnp.float32)

    out = batchnorm2d_pallas(x, gamma, beta)
    jax.block_until_ready(out)
    ref = _reference(x, gamma, beta)
    assert out.shape == (N, C, H, W)
    assert jnp.max(jnp.abs(out - ref)) < 1e-4

    # Also exercise the tiled two-phase path (multi-step reduction over N).
    N2, C2, H2, W2 = 2, 64, 8, 8
    x2 = jax.random.normal(kx2, (N2, C2, H2, W2), dtype=jnp.float32)
    out2 = batchnorm2d_pallas(x2, gamma[:C2], beta[:C2], force_two_phase=True)
    jax.block_until_ready(out2)
    ref2 = _reference(x2, gamma[:C2], beta[:C2])
    assert jnp.max(jnp.abs(out2 - ref2)) < 1e-4

    print("KERNEL_OK")
</pallas_src>

<mosaic_0001>
module attributes {stable_mosaic.version = 11 : i64} {
  func.func @_bn_fused_kernel(%arg0: i32, %arg1: memref<1x128x49xf32, #tpu.memory_space<vmem>>, %arg2: memref<128x1xf32, #tpu.memory_space<vmem>>, %arg3: memref<128x1xf32, #tpu.memory_space<vmem>>, %arg4: memref<1x128x49xf32, #tpu.memory_space<vmem>>) attributes {dimension_semantics = [#tpu.dimension_semantics<parallel>], iteration_bounds = array<i64: 3>, scalar_prefetch = 0 : i64, scratch_operands = 0 : i64, tpu.core_type = #tpu.core_type<tc>, window_params = [{transform_indices = @transform_0, window_bounds = array<i64: 1, 128, 49>}, {transform_indices = @transform_1, window_bounds = array<i64: 128, 1>}, {transform_indices = @transform_2, window_bounds = array<i64: 128, 1>}, {transform_indices = @transform_3, window_bounds = array<i64: 1, 128, 49>}]} {
    %c0 = arith.constant 0 : index
    %c0_0 = arith.constant 0 : index
    %c0_1 = arith.constant 0 : index
    %0 = vector.load %arg1[%c0, %c0_0, %c0_1] : memref<1x128x49xf32, #tpu.memory_space<vmem>>, vector<1x128x49xf32>
    %cst = arith.constant dense<0.000000e+00> : vector<128x49xf32>
    %1 = vector.multi_reduction <add>, %0, %cst [0] : vector<1x128x49xf32> to vector<128x49xf32>
    %cst_2 = arith.constant dense<0.000000e+00> : vector<128xf32>
    %2 = vector.multi_reduction <add>, %1, %cst_2 [1] : vector<128x49xf32> to vector<128xf32>
    %3 = vector.shape_cast %2 : vector<128xf32> to vector<128x1xf32>
    %4 = arith.mulf %0, %0 : vector<1x128x49xf32>
    %cst_3 = arith.constant dense<0.000000e+00> : vector<128x49xf32>
    %5 = vector.multi_reduction <add>, %4, %cst_3 [0] : vector<1x128x49xf32> to vector<128x49xf32>
    %cst_4 = arith.constant dense<0.000000e+00> : vector<128xf32>
    %6 = vector.multi_reduction <add>, %5, %cst_4 [1] : vector<128x49xf32> to vector<128xf32>
    %7 = vector.shape_cast %6 : vector<128xf32> to vector<128x1xf32>
    %cst_5 = arith.constant 0.0204081628 : f32
    %8 = vector.broadcast %cst_5 : f32 to vector<128x1xf32>
    %9 = arith.mulf %3, %8 : vector<128x1xf32>
    %cst_6 = arith.constant 0.0204081628 : f32
    %10 = vector.broadcast %cst_6 : f32 to vector<128x1xf32>
    %11 = arith.mulf %7, %10 : vector<128x1xf32>
    %12 = arith.mulf %9, %9 : vector<128x1xf32>
    %13 = arith.subf %11, %12 : vector<128x1xf32>
    %cst_7 = arith.constant 9.99999974E-6 : f32
    %14 = vector.broadcast %cst_7 : f32 to vector<128x1xf32>
    %15 = arith.addf %13, %14 : vector<128x1xf32>
    %16 = math.rsqrt %15 : vector<128x1xf32>
    %c0_8 = arith.constant 0 : index
    %c0_9 = arith.constant 0 : index
    %17 = vector.load %arg2[%c0_8, %c0_9] : memref<128x1xf32, #tpu.memory_space<vmem>>, vector<128x1xf32>
    %18 = arith.mulf %16, %17 : vector<128x1xf32>
    %c0_10 = arith.constant 0 : index
    %c0_11 = arith.constant 0 : index
    %19 = vector.load %arg3[%c0_10, %c0_11] : memref<128x1xf32, #tpu.memory_space<vmem>>, vector<128x1xf32>
    %20 = arith.mulf %9, %18 : vector<128x1xf32>
    %21 = arith.subf %19, %20 : vector<128x1xf32>
    %22 = vector.shape_cast %18 : vector<128x1xf32> to vector<1x128x1xf32>
    %23 = vector.broadcast %22 : vector<1x128x1xf32> to vector<1x128x49xf32>
    %24 = arith.mulf %0, %23 : vector<1x128x49xf32>
    %25 = vector.shape_cast %21 : vector<128x1xf32> to vector<1x128x1xf32>
    %26 = vector.broadcast %25 : vector<1x128x1xf32> to vector<1x128x49xf32>
    %27 = arith.addf %24, %26 : vector<1x128x49xf32>
    %c0_12 = arith.constant 0 : index
    %c0_13 = arith.constant 0 : index
    %c0_14 = arith.constant 0 : index
    %28 = vector.load %arg4[%c0_12, %c0_13, %c0_14] : memref<1x128x49xf32, #tpu.memory_space<vmem>>, vector<1x128x49xf32>
    tpu.vector_store %arg4[%c0_12, %c0_13, %c0_14], %27 {strides = array<i32>} : memref<1x128x49xf32, #tpu.memory_space<vmem>>, vector<1x128x49xf32>,
    return
  }
  func.func @transform_0(%arg0: i32) -> (i32, i32, i32) {
    %c0_i32 = arith.constant 0 : i32
    %c0_i32_0 = arith.constant 0 : i32
    %c0_i32_1 = arith.constant 0 : i32
    return %c0_i32, %arg0, %c0_i32_0 : i32, i32, i32
  }
  func.func @transform_1(%arg0: i32) -> (i32, i32) {
    %c0_i32 = arith.constant 0 : i32
    %c0_i32_0 = arith.constant 0 : i32
    return %arg0, %c0_i32 : i32, i32
  }
  func.func @transform_2(%arg0: i32) -> (i32, i32) {
    %c0_i32 = arith.constant 0 : i32
    %c0_i32_0 = arith.constant 0 : i32
    return %arg0, %c0_i32 : i32, i32
  }
  func.func @transform_3(%arg0: i32) -> (i32, i32, i32) {
    %c0_i32 = arith.constant 0 : i32
    %c0_i32_0 = arith.constant 0 : i32
    %c0_i32_1 = arith.constant 0 : i32
    return %c0_i32, %arg0, %c0_i32_0 : i32, i32, i32
  }
}

</mosaic_0001>

<llo_original>
// kernel: tpu_custom_call.1
$region0: #{tpu_custom_call.1}
  #allocation0 [shape = 'u32[]', space=smem, size = 0x4, offset = 0x4, fixed_abs, tag = 'smem constant byte address 0x4 - core index']
  #allocation1 [shape = 'u32[144,128]{1,0:T(1,128)}', space=vmem, size = 0x12000, scoped, tag = 'internal scratch']
  %s0 = inlined_call_operand.vmem [shape: f32[1,384,49], index: 0, kind: input, shape index: {}]
  %s1 = inlined_call_operand.vmem [shape: f32[384,1], index: 1, kind: input, shape index: {}]
  %s2 = inlined_call_operand.vmem [shape: f32[384,1], index: 2, kind: input, shape index: {}]
  %s3 = inlined_call_operand.vmem [shape: f32[1,384,49], index: 3, kind: output, shape index: {}]
  %s4 = sld [smem:[#allocation0]]
  $region45: #{tpu_custom_call.1} parent=0
    _
  %s6 = ssub.s32 1, %s4
  %s7 = scalar_select 0, %s6, %s4
  loop: start=0, step=1, limit=5
  $region2: #{tpu_custom_call.1} parent=0 // loop_pre_header
    _
  $region3: #{tpu_custom_call.1} parent=0 // loop_header
    %s9 = sphi 0, %s13
    %p10 = scmp.ge.s32.totalorder %s9, 5
    %s19 = sphi 0, %s21
    %s22 = sphi 0, %s19
    %s23 = sphi 0, %s22
    %s39 = sphi 0, %s23
    %s45 = sphi 0, %s47
    %s48 = sphi 0, %s45
    %s49 = sphi 0, %s48
    %s65 = sphi 0, %s49
    %s71 = sphi 0, %s73
    %s74 = sphi 0, %s71
    %s75 = sphi 0, %s74
    %s91 = sphi 0, %s75
    %s97 = sphi 0, %s99
    %s100 = sphi 0, %s97
    %s101 = sphi 0, %s100
    %s117 = sphi 0, %s101
  $region4: #{tpu_custom_call.1} parent=0 // loop_header_branch
    %12 = sbr.rel (%p10) target = $region8
  $region5: #{tpu_custom_call.1} parent=0 // loop_body
    %s14 = ssub.s32 %s9, 1
    %s15 = ssub.s32 %s9, 2
    %s16 = sadd.s32 %s9, 1
    %s17 = ssub.s32 %s9, %s16
    %p18 = scmp.eq.s32.totalorder %s17, 0
    %s20 = sadd.s32 %s19, 1
    %s21 = scalar_select %p18, %s19, %s20
    %p24 = pneg %p18
    %p25 = scmp.eq.s32.totalorder %s9, 2
    %p26 = por %p24, %p25
    %p27 = scmp.ne.s32.totalorder %s19, %s22
    %p28 = scmp.eq.s32.totalorder %s9, 0
    %p29 = por %p27, %p28
    %p30 = scmp.ne.s32.totalorder %s19, %s22
    %p31 = scmp.eq.s32.totalorder %s14, 2
    %p32 = por %p30, %p31
    %p33 = scmp.ne.s32.totalorder %s22, %s23
    %p34 = scmp.eq.s32.totalorder %s14, 0
    %p35 = por %p33, %p34
    %p36 = scmp.ne.s32.totalorder %s22, %s23
    %p37 = scmp.eq.s32.totalorder %s15, 2
    %p38 = por %p36, %p37
    %p40 = scmp.ne.s32.totalorder %s23, %s39
    %p41 = scmp.eq.s32.totalorder %s15, 0
    %p42 = por %p40, %p41
    %s43 = ssub.s32 %s9, %s16
    %p44 = scmp.eq.s32.totalorder %s43, 0
    %s46 = sadd.s32 %s45, 1
    %s47 = scalar_select %p44, %s45, %s46
    %p50 = pneg %p44
    %p51 = scmp.eq.s32.totalorder %s9, 2
    %p52 = por %p50, %p51
    %p53 = scmp.ne.s32.totalorder %s45, %s48
    %p54 = scmp.eq.s32.totalorder %s9, 0
    %p55 = por %p53, %p54
    %p56 = scmp.ne.s32.totalorder %s45, %s48
    %p57 = scmp.eq.s32.totalorder %s14, 2
    %p58 = por %p56, %p57
    %p59 = scmp.ne.s32.totalorder %s48, %s49
    %p60 = scmp.eq.s32.totalorder %s14, 0
    %p61 = por %p59, %p60
    %p62 = scmp.ne.s32.totalorder %s48, %s49
    %p63 = scmp.eq.s32.totalorder %s15, 2
    %p64 = por %p62, %p63
    %p66 = scmp.ne.s32.totalorder %s49, %s65
    %p67 = scmp.eq.s32.totalorder %s15, 0
    %p68 = por %p66, %p67
    %s69 = ssub.s32 %s9, %s16
    %p70 = scmp.eq.s32.totalorder %s69, 0
    %s72 = sadd.s32 %s71, 1
    %s73 = scalar_select %p70, %s71, %s72
    %p76 = pneg %p70
    %p77 = scmp.eq.s32.totalorder %s9, 2
    %p78 = por %p76, %p77
    %p79 = scmp.ne.s32.totalorder %s71, %s74
    %p80 = scmp.eq.s32.totalorder %s9, 0
    %p81 = por %p79, %p80
    %p82 = scmp.ne.s32.totalorder %s71, %s74
    %p83 = scmp.eq.s32.totalorder %s14, 2
    %p84 = por %p82, %p83
    %p85 = scmp.ne.s32.totalorder %s74, %s75
    %p86 = scmp.eq.s32.totalorder %s14, 0
    %p87 = por %p85, %p86
    %p88 = scmp.ne.s32.totalorder %s74, %s75
    %p89 = scmp.eq.s32.totalorder %s15, 2
    %p90 = por %p88, %p89
    %p92 = scmp.ne.s32.totalorder %s75, %s91
    %p93 = scmp.eq.s32.totalorder %s15, 0
    %p94 = por %p92, %p93
    %s95 = ssub.s32 %s9, %s16
    %p96 = scmp.eq.s32.totalorder %s95, 0
    %s98 = sadd.s32 %s97, 1
    %s99 = scalar_select %p96, %s97, %s98
    %p102 = pneg %p96
    %p103 = scmp.eq.s32.totalorder %s9, 2
    %p104 = por %p102, %p103
    %p105 = scmp.ne.s32.totalorder %s97, %s100
    %p106 = scmp.eq.s32.totalorder %s9, 0
    %p107 = por %p105, %p106
    %p108 = scmp.ne.s32.totalorder %s97, %s100
    %p109 = scmp.eq.s32.totalorder %s14, 2
    %p110 = por %p108, %p109
    %p111 = scmp.ne.s32.totalorder %s100, %s101
    %p112 = scmp.eq.s32.totalorder %s14, 0
    %p113 = por %p111, %p112
    %p114 = scmp.ne.s32.totalorder %s100, %s101
    %p115 = scmp.eq.s32.totalorder %s15, 2
    %p116 = por %p114, %p115
    %p118 = scmp.ne.s32.totalorder %s101, %s117
    %p119 = scmp.eq.s32.totalorder %s15, 0
    %p120 = por %p118, %p119
    %p121 = scmp.le.s32.totalorder 1, %s9
    %p122 = scmp.lt.s32.totalorder %s9, 4
    %p123 = pnand %p121, %p122
    %p124 = pneg %p123
    // Predicated region
    $region9: #{tpu_custom_call.1} parent=5 // pred_check
      _
    $region10: #{tpu_custom_call.1} parent=5 // pred_check_branch
      %126 = sbr.rel (%p123) target = $region12
    $region11: #{tpu_custom_call.1} parent=5 // pred_region
      %s127 = ssub.s32 %s9, 1
    $region12: #{tpu_custom_call.1} parent=5 // pred_fallthru
      _
    %p128 = scmp.lt.s32.totalorder %s9, 3
    // Predicated region
    $region13: #{tpu_custom_call.1} parent=5 // pred_check
      %p129 = pneg %p128
    $region14: #{tpu_custom_call.1} parent=5 // pred_check_branch
      %131 = sbr.rel (%p129) target = $region16
    $region15: #{tpu_custom_call.1} parent=5 // pred_region
      // Predicated region
      $region17: #{tpu_custom_call.1} parent=15 // pred_check
        %p132 = pneg %p29
      $region18: #{tpu_custom_call.1} parent=15 // pred_check_branch
        %134 = sbr.rel (%p132) target = $region20
      $region19: #{tpu_custom_call.1} parent=15 // pred_region
        %s135 = smul.u32 16, %s9
        %p136 = scmp.lt.s32.totalorder %s135, 47
        %s137 = scalar_select %p136, %s135, 47
        %s138 = smul.addr %s137, 8
        %s139 = scalar_lea.vmem %s0, %s138
        %s140 = smul.u32 16, %s9
      $region20: #{tpu_custom_call.1} parent=15 // pred_fallthru
        _
      // Predicated region
      $region21: #{tpu_custom_call.1} parent=15 // pred_check
        %p141 = pneg %p55
      $region22: #{tpu_custom_call.1} parent=15 // pred_check_branch
        %143 = sbr.rel (%p141) target = $region24
      $region23: #{tpu_custom_call.1} parent=15 // pred_region
        %s144 = smul.u32 16, %s9
        %p145 = scmp.lt.s32.totalorder %s144, 47
        %s146 = scalar_select %p145, %s144, 47
        %s147 = smul.addr %s146, 8
        %s148 = scalar_lea.vmem %s1, %s147
        %s149 = smul.u32 16, %s9
      $region24: #{tpu_custom_call.1} parent=15 // pred_fallthru
        _
      // Predicated region
      $region25: #{tpu_custom_call.1} parent=15 // pred_check
        %p150 = pneg %p81
      $region26: #{tpu_custom_call.1} parent=15 // pred_check_branch
        %152 = sbr.rel (%p150) target = $region28
      $region27: #{tpu_custom_call.1} parent=15 // pred_region
        %s153 = smul.u32 16, %s9
        %p154 = scmp.lt.s32.totalorder %s153, 47
        %s155 = scalar_select %p154, %s153, 47
        %s156 = smul.addr %s155, 8
        %s157 = scalar_lea.vmem %s2, %s156
        %s158 = smul.u32 16, %s9
      $region28: #{tpu_custom_call.1} parent=15 // pred_fallthru
        _
    $region16: #{tpu_custom_call.1} parent=5 // pred_fallthru
      _
    %p159 = scmp.le.s32.totalorder 1, %s9
    %p160 = scmp.lt.s32.totalorder %s9, 4
    %p161 = pnand %p159, %p160
    %p162 = pneg %p161
    // Predicated region
    $region29: #{tpu_custom_call.1} parent=5 // pred_check
      _
    $region30: #{tpu_custom_call.1} parent=5 // pred_check_branch
      %164 = sbr.rel (%p161) target = $region32
    $region31: #{tpu_custom_call.1} parent=5 // pred_region
      %s165 = ssub.s32 %s9, 1
      %s166 = smul.u32 16, %s14
      %p167 = scmp.lt.s32.totalorder %s166, 47
      %s168 = scalar_select %p167, %s166, 47
      %s169 = smul.addr %s168, 8
      %s170 = scalar_lea.vmem %s0, %s169
      %p171 = pneg %p35
      %p172 = pneg %p32
      %s173 = smul.u32 16, %s14
      %p174 = scmp.lt.s32.totalorder %s173, 47
      %s175 = scalar_select %p174, %s173, 47
      %s176 = smul.addr %s175, 8
      %s177 = scalar_lea.vmem %s1, %s176
      %p178 = pneg %p61
      %p179 = pneg %p58
      %s180 = smul.u32 16, %s14
      %p181 = scmp.lt.s32.totalorder %s180, 47
      %s182 = scalar_select %p181, %s180, 47
      %s183 = smul.addr %s182, 8
      %s184 = scalar_lea.vmem %s2, %s183
      %p185 = pneg %p87
      %p186 = pneg %p84
      %p187 = pneg %p113
      %p188 = pneg %p110
      %s189 = smul.u32 16, %s14
      %p190 = scmp.lt.s32.totalorder %s189, 47
      %s191 = scalar_select %p190, %s189, 47
      %s192 = smul.addr %s191, 8
      %s193 = scalar_lea.vmem %s3, %s192
      %s194 = smul.u32 16, %s14
      %p195 = scmp.lt.s32.totalorder %s194, 47
      %s196 = scalar_select %p195, %s194, 47
      %s197 = smul.addr %s196, 8
      %s198 = scalar_lea.vmem %s0, %s197
      %s199 = smul.u32 16, %s14
      %s200 = smul.u32 16, %s14
      %p201 = scmp.lt.s32.totalorder %s200, 47
      %s202 = scalar_select %p201, %s200, 47
      %s203 = smul.addr %s202, 8
      %s204 = scalar_lea.vmem %s1, %s203
      %s205 = smul.u32 16, %s14
      %s206 = smul.u32 16, %s14
      %p207 = scmp.lt.s32.totalorder %s206, 47
      %s208 = scalar_select %p207, %s206, 47
      %s209 = smul.addr %s208, 8
      %s210 = scalar_lea.vmem %s2, %s209
      %s211 = smul.u32 16, %s14
      %s212 = smul.u32 16, %s14
      %p213 = scmp.lt.s32.totalorder %s212, 47
      %s214 = scalar_select %p213, %s212, 47
      %s215 = smul.addr %s214, 8
      %s216 = scalar_lea.vmem %s3, %s215
      %s217 = smul.u32 16, %s14
      %v218 = vld [vmem:[%s198] sm:$0xff]
      %v219 = vld [vmem:[%s198 + $0x8] sm:$0xff]
      %v220 = vld [vmem:[%s198 + $0x10] sm:$0xff]
      %v221 = vld [vmem:[%s198 + $0x18] sm:$0xff]
      %v222 = vld [vmem:[%s198 + $0x20] sm:$0xff]
      %v223 = vld [vmem:[%s198 + $0x28] sm:$0xff]
      %v224 = vld [vmem:[%s198 + $0x30] sm:$0xff]
      %v225 = vld [vmem:[%s198 + $0x38] sm:$0xff]
      %v226 = vld [vmem:[%s198 + $0x40] sm:$0xff]
      %v227 = vld [vmem:[%s198 + $0x48] sm:$0xff]
      %v228 = vld [vmem:[%s198 + $0x50] sm:$0xff]
      %v229 = vld [vmem:[%s198 + $0x58] sm:$0xff]
      %v230 = vld [vmem:[%s198 + $0x60] sm:$0xff]
      %v231 = vld [vmem:[%s198 + $0x68] sm:$0xff]
      %v232 = vld [vmem:[%s198 + $0x70] sm:$0xff]
      %v233 = vld [vmem:[%s198 + $0x78] sm:$0xff]
      %v234 = vadd.f32 %v218, 0.0
      %v235 = vadd.f32 %v219, 0.0
      %v236 = vadd.f32 %v220, 0.0
      %v237 = vadd.f32 %v221, 0.0
      %v238 = vadd.f32 %v222, 0.0
      %v239 = vadd.f32 %v223, 0.0
      %v240 = vadd.f32 %v224, 0.0
      %v241 = vadd.f32 %v225, 0.0
      %v242 = vadd.f32 %v226, 0.0
      %v243 = vadd.f32 %v227, 0.0
      %v244 = vadd.f32 %v228, 0.0
      %v245 = vadd.f32 %v229, 0.0
      %v246 = vadd.f32 %v230, 0.0
      %v247 = vadd.f32 %v231, 0.0
      %v248 = vadd.f32 %v232, 0.0
      %v249 = vadd.f32 %v233, 0.0
      %vm250 = vcmask 400384
      %v251 = vsel %vm250, %v234, 0.0
      %252 = vadd.xlane.f32.xlu0 %v251
      %v253 = vpop.xlane.xlu0 %252
      %v254 = vsel %vm250, %v235, 0.0
      %255 = vadd.xlane.f32.xlu0 %v254
      %v256 = vpop.xlane.xlu0 %255
      %v257 = vsel %vm250, %v236, 0.0
      %258 = vadd.xlane.f32.xlu0 %v257
      %v259 = vpop.xlane.xlu0 %258
      %v260 = vsel %vm250, %v237, 0.0
      %261 = vadd.xlane.f32.xlu0 %v260
      %v262 = vpop.xlane.xlu0 %261
      %v263 = vsel %vm250, %v238, 0.0
      %264 = vadd.xlane.f32.xlu0 %v263
      %v265 = vpop.xlane.xlu0 %264
      %v266 = vsel %vm250, %v239, 0.0
      %267 = vadd.xlane.f32.xlu0 %v266
      %v268 = vpop.xlane.xlu0 %267
      %v269 = vsel %vm250, %v240, 0.0
      %270 = vadd.xlane.f32.xlu0 %v269
      %v271 = vpop.xlane.xlu0 %270
      %v272 = vsel %vm250, %v241, 0.0
      %273 = vadd.xlane.f32.xlu0 %v272
      %v274 = vpop.xlane.xlu0 %273
      %v275 = vsel %vm250, %v242, 0.0
      %276 = vadd.xlane.f32.xlu0 %v275
      %v277 = vpop.xlane.xlu0 %276
      %v278 = vsel %vm250, %v243, 0.0
      %279 = vadd.xlane.f32.xlu0 %v278
      %v280 = vpop.xlane.xlu0 %279
      %v281 = vsel %vm250, %v244, 0.0
      %282 = vadd.xlane.f32.xlu0 %v281
      %v283 = vpop.xlane.xlu0 %282
      %v284 = vsel %vm250, %v245, 0.0
      %285 = vadd.xlane.f32.xlu0 %v284
      %v286 = vpop.xlane.xlu0 %285
      %v287 = vsel %vm250, %v246, 0.0
      %288 = vadd.xlane.f32.xlu0 %v287
      %v289 = vpop.xlane.xlu0 %288
      %v290 = vsel %vm250, %v247, 0.0
      %291 = vadd.xlane.f32.xlu0 %v290
      %v292 = vpop.xlane.xlu0 %291
      %v293 = vsel %vm250, %v248, 0.0
      %294 = vadd.xlane.f32.xlu0 %v293
      %v295 = vpop.xlane.xlu0 %294
      %v296 = vsel %vm250, %v249, 0.0
      %297 = vadd.xlane.f32.xlu0 %v296
      %v298 = vpop.xlane.xlu0 %297
      %v299 = vmul.f32 %v218, %v218
      %v300 = vmul.f32 %v219, %v219
      %v301 = vmul.f32 %v220, %v220
      %v302 = vmul.f32 %v221, %v221
      %v303 = vmul.f32 %v222, %v222
      %v304 = vmul.f32 %v223, %v223
      %v305 = vmul.f32 %v224, %v224
      %v306 = vmul.f32 %v225, %v225
      %v307 = vmul.f32 %v226, %v226
      %v308 = vmul.f32 %v227, %v227
      %v309 = vmul.f32 %v228, %v228
      %v310 = vmul.f32 %v229, %v229
      %v311 = vmul.f32 %v230, %v230
      %v312 = vmul.f32 %v231, %v231
      %v313 = vmul.f32 %v232, %v232
      %v314 = vmul.f32 %v233, %v233
      %v315 = vadd.f32 %v299, 0.0
      %v316 = vadd.f32 %v300, 0.0
      %v317 = vadd.f32 %v301, 0.0
      %v318 = vadd.f32 %v302, 0.0
      %v319 = vadd.f32 %v303, 0.0
      %v320 = vadd.f32 %v304, 0.0
      %v321 = vadd.f32 %v305, 0.0
      %v322 = vadd.f32 %v306, 0.0
      %v323 = vadd.f32 %v307, 0.0
      %v324 = vadd.f32 %v308, 0.0
      %v325 = vadd.f32 %v309, 0.0
      %v326 = vadd.f32 %v310, 0.0
      %v327 = vadd.f32 %v311, 0.0
      %v328 = vadd.f32 %v312, 0.0
      %v329 = vadd.f32 %v313, 0.0
      %v330 = vadd.f32 %v314, 0.0
      %v331 = vsel %vm250, %v315, 0.0
      %332 = vadd.xlane.f32.xlu0 %v331
      %v333 = vpop.xlane.xlu0 %332
      %v334 = vsel %vm250, %v316, 0.0
      %335 = vadd.xlane.f32.xlu0 %v334
      %v336 = vpop.xlane.xlu0 %335
      %v337 = vsel %vm250, %v317, 0.0
      %338 = vadd.xlane.f32.xlu0 %v337
      %v339 = vpop.xlane.xlu0 %338
      %v340 = vsel %vm250, %v318, 0.0
      %341 = vadd.xlane.f32.xlu0 %v340
      %v342 = vpop.xlane.xlu0 %341
      %v343 = vsel %vm250, %v319, 0.0
      %344 = vadd.xlane.f32.xlu0 %v343
      %v345 = vpop.xlane.xlu0 %344
      %v346 = vsel %vm250, %v320, 0.0
      %347 = vadd.xlane.f32.xlu0 %v346
      %v348 = vpop.xlane.xlu0 %347
      %v349 = vsel %vm250, %v321, 0.0
      %350 = vadd.xlane.f32.xlu0 %v349
      %v351 = vpop.xlane.xlu0 %350
      %v352 = vsel %vm250, %v322, 0.0
      %353 = vadd.xlane.f32.xlu0 %v352
      %v354 = vpop.xlane.xlu0 %353
      %v355 = vsel %vm250, %v323, 0.0
      %356 = vadd.xlane.f32.xlu0 %v355
      %v357 = vpop.xlane.xlu0 %356
      %v358 = vsel %vm250, %v324, 0.0
      %359 = vadd.xlane.f32.xlu0 %v358
      %v360 = vpop.xlane.xlu0 %359
      %v361 = vsel %vm250, %v325, 0.0
      %362 = vadd.xlane.f32.xlu0 %v361
      %v363 = vpop.xlane.xlu0 %362
      %v364 = vsel %vm250, %v326, 0.0
      %365 = vadd.xlane.f32.xlu0 %v364
      %v366 = vpop.xlane.xlu0 %365
      %v367 = vsel %vm250, %v327, 0.0
      %368 = vadd.xlane.f32.xlu0 %v367
      %v369 = vpop.xlane.xlu0 %368
      %v370 = vsel %vm250, %v328, 0.0
      %371 = vadd.xlane.f32.xlu0 %v370
      %v372 = vpop.xlane.xlu0 %371
      %v373 = vsel %vm250, %v329, 0.0
      %374 = vadd.xlane.f32.xlu0 %v373
      %v375 = vpop.xlane.xlu0 %374
      %v376 = vsel %vm250, %v330, 0.0
      %377 = vadd.xlane.f32.xlu0 %v376
      %v378 = vpop.xlane.xlu0 %377
      %v379 = vmul.f32 %v253, 0.020408163
      %v380 = vmul.f32 %v256, 0.020408163
      %v381 = vmul.f32 %v259, 0.020408163
      %v382 = vmul.f32 %v262, 0.020408163
      %v383 = vmul.f32 %v265, 0.020408163
      %v384 = vmul.f32 %v268, 0.020408163
      %v385 = vmul.f32 %v271, 0.020408163
      %v386 = vmul.f32 %v274, 0.020408163
      %v387 = vmul.f32 %v277, 0.020408163
      %v388 = vmul.f32 %v280, 0.020408163
      %v389 = vmul.f32 %v283, 0.020408163
      %v390 = vmul.f32 %v286, 0.020408163
      %v391 = vmul.f32 %v289, 0.020408163
      %v392 = vmul.f32 %v292, 0.020408163
      %v393 = vmul.f32 %v295, 0.020408163
      %v394 = vmul.f32 %v298, 0.020408163
      %v395 = vmul.f32 %v333, 0.020408163
      %v396 = vmul.f32 %v336, 0.020408163
      %v397 = vmul.f32 %v339, 0.020408163
      %v398 = vmul.f32 %v342, 0.020408163
      %v399 = vmul.f32 %v345, 0.020408163
      %v400 = vmul.f32 %v348, 0.020408163
      %v401 = vmul.f32 %v351, 0.020408163
      %v402 = vmul.f32 %v354, 0.020408163
      %v403 = vmul.f32 %v357, 0.020408163
      %v404 = vmul.f32 %v360, 0.020408163
      %v405 = vmul.f32 %v363, 0.020408163
      %v406 = vmul.f32 %v366, 0.020408163
      %v407 = vmul.f32 %v369, 0.020408163
      %v408 = vmul.f32 %v372, 0.020408163
      %v409 = vmul.f32 %v375, 0.020408163
      %v410 = vmul.f32 %v378, 0.020408163
      %v411 = vmul.f32 %v379, %v379
      %v412 = vmul.f32 %v380, %v380
      %v413 = vmul.f32 %v381, %v381
      %v414 = vmul.f32 %v382, %v382
      %v415 = vmul.f32 %v383, %v383
      %v416 = vmul.f32 %v384, %v384
      %v417 = vmul.f32 %v385, %v385
      %v418 = vmul.f32 %v386, %v386
      %v419 = vmul.f32 %v387, %v387
      %v420 = vmul.f32 %v388, %v388
      %v421 = vmul.f32 %v389, %v389
      %v422 = vmul.f32 %v390, %v390
      %v423 = vmul.f32 %v391, %v391
      %v424 = vmul.f32 %v392, %v392
      %v425 = vmul.f32 %v393, %v393
      %v426 = vmul.f32 %v394, %v394
      %v427 = vsub.f32 %v395, %v411
      %v428 = vsub.f32 %v396, %v412
      %v429 = vsub.f32 %v397, %v413
      %v430 = vsub.f32 %v398, %v414
      %v431 = vsub.f32 %v399, %v415
      %v432 = vsub.f32 %v400, %v416
      %v433 = vsub.f32 %v401, %v417
      %v434 = vsub.f32 %v402, %v418
      %v435 = vsub.f32 %v403, %v419
      %v436 = vsub.f32 %v404, %v420
      %v437 = vsub.f32 %v405, %v421
      %v438 = vsub.f32 %v406, %v422
      %v439 = vsub.f32 %v407, %v423
      %v440 = vsub.f32 %v408, %v424
      %v441 = vsub.f32 %v409, %v425
      %v442 = vsub.f32 %v410, %v426
      %v443 = vadd.f32 %v427, 1e-05
      %v444 = vadd.f32 %v428, 1e-05
      %v445 = vadd.f32 %v429, 1e-05
      %v446 = vadd.f32 %v430, 1e-05
      %v447 = vadd.f32 %v431, 1e-05
      %v448 = vadd.f32 %v432, 1e-05
      %v449 = vadd.f32 %v433, 1e-05
      %v450 = vadd.f32 %v434, 1e-05
      %v451 = vadd.f32 %v435, 1e-05
      %v452 = vadd.f32 %v436, 1e-05
      %v453 = vadd.f32 %v437, 1e-05
      %v454 = vadd.f32 %v438, 1e-05
      %v455 = vadd.f32 %v439, 1e-05
      %v456 = vadd.f32 %v440, 1e-05
      %v457 = vadd.f32 %v441, 1e-05
      %v458 = vadd.f32 %v442, 1e-05
      %v459 = vrsqrt.pop %v443
      %v460 = vrsqrt.pop %v444
      %v461 = vrsqrt.pop %v445
      %v462 = vrsqrt.pop %v446
      %v463 = vrsqrt.pop %v447
      %v464 = vrsqrt.pop %v448
      %v465 = vrsqrt.pop %v449
      %v466 = vrsqrt.pop %v450
      %v467 = vrsqrt.pop %v451
      %v468 = vrsqrt.pop %v452
      %v469 = vrsqrt.pop %v453
      %v470 = vrsqrt.pop %v454
      %v471 = vrsqrt.pop %v455
      %v472 = vrsqrt.pop %v456
      %v473 = vrsqrt.pop %v457
      %v474 = vrsqrt.pop %v458
      %v475 = vld [vmem:[%s204] sm:$0xff]
      %v476 = vld [vmem:[%s204 + $0x8] sm:$0xff]
      %v477 = vld [vmem:[%s204 + $0x10] sm:$0xff]
      %v478 = vld [vmem:[%s204 + $0x18] sm:$0xff]
      %v479 = vld [vmem:[%s204 + $0x20] sm:$0xff]
      %v480 = vld [vmem:[%s204 + $0x28] sm:$0xff]
      %v481 = vld [vmem:[%s204 + $0x30] sm:$0xff]
      %v482 = vld [vmem:[%s204 + $0x38] sm:$0xff]
      %v483 = vld [vmem:[%s204 + $0x40] sm:$0xff]
      %v484 = vld [vmem:[%s204 + $0x48] sm:$0xff]
      %v485 = vld [vmem:[%s204 + $0x50] sm:$0xff]
      %v486 = vld [vmem:[%s204 + $0x58] sm:$0xff]
      %v487 = vld [vmem:[%s204 + $0x60] sm:$0xff]
      %v488 = vld [vmem:[%s204 + $0x68] sm:$0xff]
      %v489 = vld [vmem:[%s204 + $0x70] sm:$0xff]
      %v490 = vld [vmem:[%s204 + $0x78] sm:$0xff]
      %v491 = vmul.f32 %v459, %v475
      %v492 = vmul.f32 %v460, %v476
      %v493 = vmul.f32 %v461, %v477
      %v494 = vmul.f32 %v462, %v478
      %v495 = vmul.f32 %v463, %v479
      %v496 = vmul.f32 %v464, %v480
      %v497 = vmul.f32 %v465, %v481
      %v498 = vmul.f32 %v466, %v482
      %v499 = vmul.f32 %v467, %v483
      %v500 = vmul.f32 %v468, %v484
      %v501 = vmul.f32 %v469, %v485
      %v502 = vmul.f32 %v470, %v486
      %v503 = vmul.f32 %v471, %v487
      %v504 = vmul.f32 %v472, %v488
      %v505 = vmul.f32 %v473, %v489
      %v506 = vmul.f32 %v474, %v490
      %v507 = vld [vmem:[%s210] sm:$0xff]
      %v508 = vld [vmem:[%s210 + $0x8] sm:$0xff]
      %v509 = vld [vmem:[%s210 + $0x10] sm:$0xff]
      %v510 = vld [vmem:[%s210 + $0x18] sm:$0xff]
      %v511 = vld [vmem:[%s210 + $0x20] sm:$0xff]
      %v512 = vld [vmem:[%s210 + $0x28] sm:$0xff]
      %v513 = vld [vmem:[%s210 + $0x30] sm:$0xff]
      %v514 = vld [vmem:[%s210 + $0x38] sm:$0xff]
      %v515 = vld [vmem:[%s210 + $0x40] sm:$0xff]
      %v516 = vld [vmem:[%s210 + $0x48] sm:$0xff]
      %v517 = vld [vmem:[%s210 + $0x50] sm:$0xff]
      %v518 = vld [vmem:[%s210 + $0x58] sm:$0xff]
      %v519 = vld [vmem:[%s210 + $0x60] sm:$0xff]
      %v520 = vld [vmem:[%s210 + $0x68] sm:$0xff]
      %v521 = vld [vmem:[%s210 + $0x70] sm:$0xff]
      %v522 = vld [vmem:[%s210 + $0x78] sm:$0xff]
      %v523 = vmul.f32 %v379, %v491
      %v524 = vmul.f32 %v380, %v492
      %v525 = vmul.f32 %v381, %v493
      %v526 = vmul.f32 %v382, %v494
      %v527 = vmul.f32 %v383, %v495
      %v528 = vmul.f32 %v384, %v496
      %v529 = vmul.f32 %v385, %v497
      %v530 = vmul.f32 %v386, %v498
      %v531 = vmul.f32 %v387, %v499
      %v532 = vmul.f32 %v388, %v500
      %v533 = vmul.f32 %v389, %v501
      %v534 = vmul.f32 %v390, %v502
      %v535 = vmul.f32 %v391, %v503
      %v536 = vmul.f32 %v392, %v504
      %v537 = vmul.f32 %v393, %v505
      %v538 = vmul.f32 %v394, %v506
      %v539 = vsub.f32 %v507, %v523
      %v540 = vsub.f32 %v508, %v524
      %v541 = vsub.f32 %v509, %v525
      %v542 = vsub.f32 %v510, %v526
      %v543 = vsub.f32 %v511, %v527
      %v544 = vsub.f32 %v512, %v528
      %v545 = vsub.f32 %v513, %v529
      %v546 = vsub.f32 %v514, %v530
      %v547 = vsub.f32 %v515, %v531
      %v548 = vsub.f32 %v516, %v532
      %v549 = vsub.f32 %v517, %v533
      %v550 = vsub.f32 %v518, %v534
      %v551 = vsub.f32 %v519, %v535
      %v552 = vsub.f32 %v520, %v536
      %v553 = vsub.f32 %v521, %v537
      %v554 = vsub.f32 %v522, %v538
      %556 = vset.pattern.permute.xlu0 0
      %557 = vperm.xlu0 %556, %v491
      %v558 = vpop.permute.xlu0 %557
      %561 = vset.pattern.permute.xlu0 0
      %562 = vperm.xlu0 %561, %v492
      %v563 = vpop.permute.xlu0 %562
      %566 = vset.pattern.permute.xlu0 0
      %567 = vperm.xlu0 %566, %v493
      %v568 = vpop.permute.xlu0 %567
      %571 = vset.pattern.permute.xlu0 0
      %572 = vperm.xlu0 %571, %v494
      %v573 = vpop.permute.xlu0 %572
      %576 = vset.pattern.permute.xlu0 0
      %577 = vperm.xlu0 %576, %v495
      %v578 = vpop.permute.xlu0 %577
      %581 = vset.pattern.permute.xlu0 0
      %582 = vperm.xlu0 %581, %v496
      %v583 = vpop.permute.xlu0 %582
      %586 = vset.pattern.permute.xlu0 0
      %587 = vperm.xlu0 %586, %v497
      %v588 = vpop.permute.xlu0 %587
      %591 = vset.pattern.permute.xlu0 0
      %592 = vperm.xlu0 %591, %v498
      %v593 = vpop.permute.xlu0 %592
      %596 = vset.pattern.permute.xlu0 0
      %597 = vperm.xlu0 %596, %v499
      %v598 = vpop.permute.xlu0 %597
      %601 = vset.pattern.permute.xlu0 0
      %602 = vperm.xlu0 %601, %v500
      %v603 = vpop.permute.xlu0 %602
      %606 = vset.pattern.permute.xlu0 0
      %607 = vperm.xlu0 %606, %v501
      %v608 = vpop.permute.xlu0 %607
      %611 = vset.pattern.permute.xlu0 0
      %612 = vperm.xlu0 %611, %v502
      %v613 = vpop.permute.xlu0 %612
      %616 = vset.pattern.permute.xlu0 0
      %617 = vperm.xlu0 %616, %v503
      %v618 = vpop.permute.xlu0 %617
      %621 = vset.pattern.permute.xlu0 0
      %622 = vperm.xlu0 %621, %v504
      %v623 = vpop.permute.xlu0 %622
      %626 = vset.pattern.permute.xlu0 0
      %627 = vperm.xlu0 %626, %v505
      %v628 = vpop.permute.xlu0 %627
      %631 = vset.pattern.permute.xlu0 0
      %632 = vperm.xlu0 %631, %v506
      %v633 = vpop.permute.xlu0 %632
      %v635 = vmul.f32 %v218, %v558
      %v636 = vmul.f32 %v219, %v563
      %v637 = vmul.f32 %v220, %v568
      %v638 = vmul.f32 %v221, %v573
      %v639 = vmul.f32 %v222, %v578
      %v640 = vmul.f32 %v223, %v583
      %v641 = vmul.f32 %v224, %v588
      %v642 = vmul.f32 %v225, %v593
      %v643 = vmul.f32 %v226, %v598
      %v644 = vmul.f32 %v227, %v603
      %v645 = vmul.f32 %v228, %v608
      %v646 = vmul.f32 %v229, %v613
      %v647 = vmul.f32 %v230, %v618
      %v648 = vmul.f32 %v231, %v623
      %v649 = vmul.f32 %v232, %v628
      %v650 = vmul.f32 %v233, %v633
      %652 = vset.pattern.permute.xlu0 0
      %653 = vperm.xlu0 %652, %v539
      %v654 = vpop.permute.xlu0 %653
      %657 = vset.pattern.permute.xlu0 0
      %658 = vperm.xlu0 %657, %v540
      %v659 = vpop.permute.xlu0 %658
      %662 = vset.pattern.permute.xlu0 0
      %663 = vperm.xlu0 %662, %v541
      %v664 = vpop.permute.xlu0 %663
      %667 = vset.pattern.permute.xlu0 0
      %668 = vperm.xlu0 %667, %v542
      %v669 = vpop.permute.xlu0 %668
      %672 = vset.pattern.permute.xlu0 0
      %673 = vperm.xlu0 %672, %v543
      %v674 = vpop.permute.xlu0 %673
      %677 = vset.pattern.permute.xlu0 0
      %678 = vperm.xlu0 %677, %v544
      %v679 = vpop.permute.xlu0 %678
      %682 = vset.pattern.permute.xlu0 0
      %683 = vperm.xlu0 %682, %v545
      %v684 = vpop.permute.xlu0 %683
      %687 = vset.pattern.permute.xlu0 0
      %688 = vperm.xlu0 %687, %v546
      %v689 = vpop.permute.xlu0 %688
      %692 = vset.pattern.permute.xlu0 0
      %693 = vperm.xlu0 %692, %v547
      %v694 = vpop.permute.xlu0 %693
      %697 = vset.pattern.permute.xlu0 0
      %698 = vperm.xlu0 %697, %v548
      %v699 = vpop.permute.xlu0 %698
      %702 = vset.pattern.permute.xlu0 0
      %703 = vperm.xlu0 %702, %v549
      %v704 = vpop.permute.xlu0 %703
      %707 = vset.pattern.permute.xlu0 0
      %708 = vperm.xlu0 %707, %v550
      %v709 = vpop.permute.xlu0 %708
      %712 = vset.pattern.permute.xlu0 0
      %713 = vperm.xlu0 %712, %v551
      %v714 = vpop.permute.xlu0 %713
      %717 = vset.pattern.permute.xlu0 0
      %718 = vperm.xlu0 %717, %v552
      %v719 = vpop.permute.xlu0 %718
      %722 = vset.pattern.permute.xlu0 0
      %723 = vperm.xlu0 %722, %v553
      %v724 = vpop.permute.xlu0 %723
      %727 = vset.pattern.permute.xlu0 0
      %728 = vperm.xlu0 %727, %v554
      %v729 = vpop.permute.xlu0 %728
      %v731 = vadd.f32 %v635, %v654
      %v732 = vadd.f32 %v636, %v659
      %v733 = vadd.f32 %v637, %v664
      %v734 = vadd.f32 %v638, %v669
      %v735 = vadd.f32 %v639, %v674
      %v736 = vadd.f32 %v640, %v679
      %v737 = vadd.f32 %v641, %v684
      %v738 = vadd.f32 %v642, %v689
      %v739 = vadd.f32 %v643, %v694
      %v740 = vadd.f32 %v644, %v699
      %v741 = vadd.f32 %v645, %v704
      %v742 = vadd.f32 %v646, %v709
      %v743 = vadd.f32 %v647, %v714
      %v744 = vadd.f32 %v648, %v719
      %v745 = vadd.f32 %v649, %v724
      %v746 = vadd.f32 %v650, %v729
      %747 = vst.msk [vmem:[%s216] sm:$0xff] %vm250, %v731
      %748 = vst.msk [vmem:[%s216 + $0x8] sm:$0xff] %vm250, %v732
      %749 = vst.msk [vmem:[%s216 + $0x10] sm:$0xff] %vm250, %v733
      %750 = vst.msk [vmem:[%s216 + $0x18] sm:$0xff] %vm250, %v734
      %751 = vst.msk [vmem:[%s216 + $0x20] sm:$0xff] %vm250, %v735
      %752 = vst.msk [vmem:[%s216 + $0x28] sm:$0xff] %vm250, %v736
      %753 = vst.msk [vmem:[%s216 + $0x30] sm:$0xff] %vm250, %v737
      %754 = vst.msk [vmem:[%s216 + $0x38] sm:$0xff] %vm250, %v738
      %755 = vst.msk [vmem:[%s216 + $0x40] sm:$0xff] %vm250, %v739
      %756 = vst.msk [vmem:[%s216 + $0x48] sm:$0xff] %vm250, %v740
      %757 = vst.msk [vmem:[%s216 + $0x50] sm:$0xff] %vm250, %v741
      %758 = vst.msk [vmem:[%s216 + $0x58] sm:$0xff] %vm250, %v742
      %759 = vst.msk [vmem:[%s216 + $0x60] sm:$0xff] %vm250, %v743
      %760 = vst.msk [vmem:[%s216 + $0x68] sm:$0xff] %vm250, %v744
      %761 = vst.msk [vmem:[%s216 + $0x70] sm:$0xff] %vm250, %v745
      %762 = vst.msk [vmem:[%s216 + $0x78] sm:$0xff] %vm250, %v746
      %s763 = smul.u32 16, %s14
      %p764 = scmp.lt.s32.totalorder %s763, 47
      %s765 = scalar_select %p764, %s763, 47
      %s766 = smul.addr %s765, 8
      %s767 = scalar_lea.vmem %s3, %s766
      // Predicated region
      $region33: #{tpu_custom_call.1} parent=31 // pred_check
        %p768 = pneg %p110
      $region34: #{tpu_custom_call.1} parent=31 // pred_check_branch
        %770 = sbr.rel (%p768) target = $region36
      $region35: #{tpu_custom_call.1} parent=31 // pred_region
        %s771 = smul.u32 16, %s14
      $region36: #{tpu_custom_call.1} parent=31 // pred_fallthru
        _
    $region32: #{tpu_custom_call.1} parent=5 // pred_fallthru
      _
    %p772 = scmp.le.s32.totalorder 2, %s9
    // Predicated region
    $region37: #{tpu_custom_call.1} parent=5 // pred_check
      %p773 = pneg %p772
    $region38: #{tpu_custom_call.1} parent=5 // pred_check_branch
      %775 = sbr.rel (%p773) target = $region40
    $region39: #{tpu_custom_call.1} parent=5 // pred_region
      %s776 = ssub.s32 %s9, 2
      // Predicated region
      $region41: #{tpu_custom_call.1} parent=39 // pred_check
        %p777 = pneg %p116
      $region42: #{tpu_custom_call.1} parent=39 // pred_check_branch
        %779 = sbr.rel (%p777) target = $region44
      $region43: #{tpu_custom_call.1} parent=39 // pred_region
        %s780 = smul.u32 16, %s15
        %p781 = scmp.lt.s32.totalorder %s780, 47
        %s782 = scalar_select %p781, %s780, 47
        %s783 = smul.addr %s782, 8
        %s784 = scalar_lea.vmem %s3, %s783
      $region44: #{tpu_custom_call.1} parent=39 // pred_fallthru
        _
    $region40: #{tpu_custom_call.1} parent=5 // pred_fallthru
      _
  $region6: #{tpu_custom_call.1} parent=0 // loop_footer
    %s13 = sadd.s32 1, %s9
  $region7: #{tpu_custom_call.1} parent=0 // loop_footer_branch
    %8 = sbr.rel target = $region3
  $region8: #{tpu_custom_call.1} parent=0 // loop_exit
    _

</llo_original>
